<compile_context>
chip_gen: v6e
topology: v6e:2x2x1
jax: 0.10.0
libtpu: 0.0.40
codegen_flags: <defaults>
</compile_context>

<pallas_src>
import functools

import jax
import jax.numpy as jnp
from jax.experimental import pallas as pl
from jax.experimental.pallas import tpu as pltpu

# The spec module sets query_channels = 1, so the default score scale is 1.0.
QUERY_CHANNELS = 1
KEY_CHANNELS = 1

# TODO(synk): dropout_p is 0.0 in the reference call, so dropout is an
# identity and is not implemented (would need pltpu.prng_* for p > 0).
# TODO(synk): for tiny D/M the batched einsum under-fills the MXU; a VPU
# multiply-add formulation only matters if the kernel ever stops being
# HBM-bandwidth bound, so the MXU path is kept for generality.


def _attn_kernel(q_ref, k_ref, v_ref, o_ref, m_sc, num_sc, den_sc, *, scale):
    # q_ref: (TB, M, D), k_ref: (TB, D, TN), v_ref: (TB, M, TN)
    # o_ref: (1, TB, M) -- resident across the N axis (written at the last step)
    # m_sc/num_sc/den_sc: (TB, M) f32 online-softmax state.
    n_idx = pl.program_id(1)

    @pl.when(n_idx == 0)
    def _init():
        m_sc[...] = jnp.full(m_sc.shape, -jnp.inf, m_sc.dtype)
        num_sc[...] = jnp.zeros(num_sc.shape, num_sc.dtype)
        den_sc[...] = jnp.zeros(den_sc.shape, den_sc.dtype)

    q = q_ref[...]
    k = k_ref[...]
    v = v_ref[...].astype(jnp.float32)

    # scores for this N tile: (TB, M, TN)
    w = jnp.einsum("bmd,bdn->bmn", q, k, preferred_element_type=jnp.float32)
    if scale != 1.0:  # constant-folded away for query_channels == 1
        w = w * scale

    # Online (flash-style) softmax-weighted sum over N; the probability
    # matrix is never materialized.
    m_prev = m_sc[...]                                   # (TB, M)
    m_new = jnp.maximum(m_prev, jnp.max(w, axis=-1))     # (TB, M)
    alpha = jnp.exp(m_prev - m_new)                      # rescale old state
    e = jnp.exp(w - m_new[..., None])                    # (TB, M, TN)
    num_sc[...] = alpha * num_sc[...] + jnp.sum(e * v, axis=-1)
    den_sc[...] = alpha * den_sc[...] + jnp.sum(e, axis=-1)
    m_sc[...] = m_new

    @pl.when(n_idx == pl.num_programs(1) - 1)
    def _finalize():
        # Exact divide: only TB*M divides per step, so it is essentially free
        # and avoids the approximate-reciprocal accuracy concern.
        o_ref[0] = (num_sc[...] / den_sc[...]).astype(o_ref.dtype)


def _tpu_params():
    """(vmem_capacity_bytes, tensorcores_per_chip) with safe fallbacks."""
    vmem_cap = 64 * 1024 * 1024  # v7x floor: smallest per-TC VMEM
    n_cores = 1
    try:
        vmem_cap = int(pltpu.get_tpu_info().vmem_capacity_bytes)
    except Exception:
        pass
    try:
        kind = str(getattr(jax.devices()[0], "device_kind", "")).lower()
        if "v7" in kind or "7x" in kind:
            n_cores = 2  # v7x: 2 TensorCores per chip
    except Exception:
        pass
    return vmem_cap, n_cores


def _plan_tiling(B, M, D, N, itemsize):
    """Pick (TB, G, TN, NT, vmem_limit_bytes) for the 2-D grid (G, NT)."""
    vmem_cap, n_cores = _tpu_params()
    # Scoped-VMEM limit ~3/4 of physical: ~48 MiB on v7x, ~96 MiB on v5e/v6e.
    vmem_limit = min(int(vmem_cap * 3 // 4), 100 * 1024 * 1024)
    budget = int(vmem_limit * 0.65)  # headroom for Mosaic internal scratch

    # N tile: full axis unless N is a multiple of 128, in which case cap the
    # tile so the f32 score/exp temporaries stop limiting the batch pack.
    tn = N
    for cand in (512, 256, 128):
        if N > cand and N % cand == 0:
            tn = cand
            break

    per_batch = (2 * (M * D + D * tn + M * tn) * itemsize  # double-buffered I/O
                 + 3 * M * tn * 4                          # f32 scores/exp/e*v
                 + 3 * M * 4                               # online-softmax state
                 + 2 * M * itemsize)                       # output slab

    # Only keep >= 2 grid steps for the "parallel" axis on 2-TC chips (v7x);
    # on single-TC chips the grid is a sequential loop, so one big step wins.
    min_steps = 2 if (n_cores >= 2 and B >= 2) else 1

    tb = 1
    for cand in range(1, B + 1):
        if B % cand:
            continue
        if (B // cand) < min_steps:
            break
        if cand * per_batch <= budget:
            tb = cand
    return tb, B // tb, tn, N // tn, vmem_limit


def attention_model(query, key, value, dropout_p=0.0,
                    query_channels=QUERY_CHANNELS):
    """query: (B, M, D), key: (B, D, N), value: (B, M, N) -> (B, M, 1)."""
    B, M, D = query.shape
    Bk, Dk, N = key.shape
    assert (Bk, Dk) == (B, D)
    assert value.shape == (B, M, N)
    assert dropout_p == 0.0  # dropout is an identity at p = 0.0

    scale = float(1.0 / (query_channels ** 0.25))
    itemsize = jnp.dtype(query.dtype).itemsize
    TB, G, TN, NT, vmem_limit = _plan_tiling(B, M, D, N, itemsize)

    cost = pl.CostEstimate(
        flops=2 * B * M * D * N + 6 * B * M * N,
        transcendentals=B * M * N + B * M * NT,
        bytes_accessed=(B * M * D + B * D * N + B * M * N + B * M) * itemsize,
    )

    out_gtm = pl.pallas_call(
        functools.partial(_attn_kernel, scale=scale),
        # (G, TB, M): last two block dims equal the full array dims and each
        # step stores a dense (TB, M) slab instead of 1-lane (..., 1) stores.
        out_shape=jax.ShapeDtypeStruct((G, TB, M), query.dtype),
        grid_spec=pltpu.PrefetchScalarGridSpec(
            num_scalar_prefetch=0,
            grid=(G, NT),
            in_specs=[
                pl.BlockSpec((TB, M, D), lambda g, n: (g, 0, 0)),
                pl.BlockSpec((TB, D, TN), lambda g, n: (g, 0, n)),
                pl.BlockSpec((TB, M, TN), lambda g, n: (g, 0, n)),
            ],
            out_specs=pl.BlockSpec((1, TB, M), lambda g, n: (g, 0, 0)),
            scratch_shapes=[pltpu.VMEM((TB, M), jnp.float32)] * 3,
        ),
        compiler_params=pltpu.CompilerParams(
            dimension_semantics=("parallel", "arbitrary"),
            vmem_limit_bytes=int(vmem_limit),
        ),
        cost_estimate=cost,
    )(query, key, value)

    # (G, TB, M) -> (B, M) -> (B, M, 1): matches the torch Model's output.
    return out_gtm.reshape(B, M)[:, :, None]


def _reference(query, key, value, query_channels=QUERY_CHANNELS):
    # Pure-JAX reference mirroring the PyTorch forward, at full f32 precision
    # so it is a stable gold standard regardless of the TPU matmul default.
    scale = 1.0 / (query_channels ** 0.25)
    hp = jax.lax.Precision.HIGHEST
    q = query[:, :, None, :]                                  # (B, M, 1, D)
    k = key[:, None, :, :]                                    # (B, 1, D, N)
    w = jnp.einsum("bmxd,bydn->bmxn", q, k, precision=hp) * scale
    p = jax.nn.softmax(w, axis=-1)
    v = jnp.einsum("bmxn,bmny->bmxy", p, value[..., None], precision=hp)
    return v[..., 0]                                          # (B, M, 1)


if __name__ == "__main__":
    # Small shapes consistent with the module's forward:
    #   query (B, M, D), key (B, D, N), value (B, M, N)
    B, M, D, N = 2, 8, 32, 16
    k0, k1, k2 = jax.random.split(jax.random.PRNGKey(0), 3)
    query = jax.random.normal(k0, (B, M, D), dtype=jnp.float32)
    key = jax.random.normal(k1, (B, D, N), dtype=jnp.float32)
    value = jax.random.normal(k2, (B, M, N), dtype=jnp.float32)

    out = attention_model(query, key, value)
    out = jax.block_until_ready(out)

    ref = _reference(query, key, value)
    assert out.shape == (B, M, 1)
    # Tolerance covers MXU f32-emulation differences between the in-kernel
    # matmul and the HIGHEST-precision reference; structural bugs are O(1).
    assert jnp.allclose(out, ref, atol=2e-2, rtol=2e-2), "mismatch vs reference"
    print("KERNEL_OK")
</pallas_src>

<mosaic_0001>
module attributes {stable_mosaic.version = 11 : i64} {
  func.func @_attn_kernel(%arg0: i32, %arg1: i32, %arg2: memref<2x8x32xf32, #tpu.memory_space<vmem>>, %arg3: memref<2x32x16xf32, #tpu.memory_space<vmem>>, %arg4: memref<2x8x16xf32, #tpu.memory_space<vmem>>, %arg5: memref<1x2x8xf32, #tpu.memory_space<vmem>>, %arg6: memref<2x8xf32, #tpu.memory_space<vmem>>, %arg7: memref<2x8xf32, #tpu.memory_space<vmem>>, %arg8: memref<2x8xf32, #tpu.memory_space<vmem>>) attributes {dimension_semantics = [#tpu.dimension_semantics<parallel>, #tpu.dimension_semantics<arbitrary>], iteration_bounds = array<i64: 1, 1>, scalar_prefetch = 0 : i64, scratch_operands = 3 : i64, tpu.core_type = #tpu.core_type<tc>, window_params = [{transform_indices = @transform_0, window_bounds = array<i64: 2, 8, 32>}, {transform_indices = @transform_1, window_bounds = array<i64: 2, 32, 16>}, {transform_indices = @transform_2, window_bounds = array<i64: 2, 8, 16>}, {transform_indices = @transform_3, window_bounds = array<i64: 1, 2, 8>}]} {
    %c0_i32 = arith.constant 0 : i32
    %0 = arith.cmpi eq, %arg1, %c0_i32 : i32
    %1 = arith.extui %0 : i1 to i32
    %c0_i32_0 = arith.constant 0 : i32
    %2 = arith.cmpi ne, %1, %c0_i32_0 : i32
    scf.if %2 {
      %cst_26 = arith.constant 0xFF800000 : f32
      %31 = vector.broadcast %cst_26 : f32 to vector<2x8xf32>
      %c0_27 = arith.constant 0 : index
      %c0_28 = arith.constant 0 : index
      %32 = vector.load %arg6[%c0_27, %c0_28] : memref<2x8xf32, #tpu.memory_space<vmem>>, vector<2x8xf32>
      tpu.vector_store %arg6[%c0_27, %c0_28], %31 {strides = array<i32>} : memref<2x8xf32, #tpu.memory_space<vmem>>, vector<2x8xf32>,
      %cst_29 = arith.constant 0.000000e+00 : f32
      %33 = vector.broadcast %cst_29 : f32 to vector<2x8xf32>
      %c0_30 = arith.constant 0 : index
      %c0_31 = arith.constant 0 : index
      %34 = vector.load %arg7[%c0_30, %c0_31] : memref<2x8xf32, #tpu.memory_space<vmem>>, vector<2x8xf32>
      tpu.vector_store %arg7[%c0_30, %c0_31], %33 {strides = array<i32>} : memref<2x8xf32, #tpu.memory_space<vmem>>, vector<2x8xf32>,
      %cst_32 = arith.constant 0.000000e+00 : f32
      %35 = vector.broadcast %cst_32 : f32 to vector<2x8xf32>
      %c0_33 = arith.constant 0 : index
      %c0_34 = arith.constant 0 : index
      %36 = vector.load %arg8[%c0_33, %c0_34] : memref<2x8xf32, #tpu.memory_space<vmem>>, vector<2x8xf32>
      tpu.vector_store %arg8[%c0_33, %c0_34], %35 {strides = array<i32>} : memref<2x8xf32, #tpu.memory_space<vmem>>, vector<2x8xf32>,
    } else {
    }
    %c0 = arith.constant 0 : index
    %c0_1 = arith.constant 0 : index
    %c0_2 = arith.constant 0 : index
    %3 = vector.load %arg2[%c0, %c0_1, %c0_2] : memref<2x8x32xf32, #tpu.memory_space<vmem>>, vector<2x8x32xf32>
    %c0_3 = arith.constant 0 : index
    %c0_4 = arith.constant 0 : index
    %c0_5 = arith.constant 0 : index
    %4 = vector.load %arg3[%c0_3, %c0_4, %c0_5] : memref<2x32x16xf32, #tpu.memory_space<vmem>>, vector<2x32x16xf32>
    %c0_6 = arith.constant 0 : index
    %c0_7 = arith.constant 0 : index
    %c0_8 = arith.constant 0 : index
    %5 = vector.load %arg4[%c0_6, %c0_7, %c0_8] : memref<2x8x16xf32, #tpu.memory_space<vmem>>, vector<2x8x16xf32>
    "tpu.trace_start"() <{level = 10 : i32, message = "bmd,bdn->bmn"}> : () -> ()
    %cst = arith.constant dense<0.000000e+00> : vector<2x8x16xf32>
    %6 = tpu.matmul %3, %4, %cst {dimension_numbers = #tpu.dot_dimension_numbers<[2], [1], [1], [2], [0, 0, 0, 1, 1, 2], [0], [0]>} : vector<2x8x32xf32>, vector<2x32x16xf32>, vector<2x8x16xf32> -> vector<2x8x16xf32>
    "tpu.trace_stop"() : () -> ()
    %c0_9 = arith.constant 0 : index
    %c0_10 = arith.constant 0 : index
    %7 = vector.load %arg6[%c0_9, %c0_10] : memref<2x8xf32, #tpu.memory_space<vmem>>, vector<2x8xf32>
    %cst_11 = arith.constant dense<0xFF800000> : vector<2x8xf32>
    %8 = vector.multi_reduction <maximumf>, %6, %cst_11 [2] : vector<2x8x16xf32> to vector<2x8xf32>
    %9 = arith.maximumf %7, %8 : vector<2x8xf32>
    %10 = arith.subf %7, %9 : vector<2x8xf32>
    %11 = math.exp %10 : vector<2x8xf32>
    %12 = vector.shape_cast %9 : vector<2x8xf32> to vector<2x8x1xf32>
    %13 = vector.broadcast %12 : vector<2x8x1xf32> to vector<2x8x16xf32>
    %14 = arith.subf %6, %13 : vector<2x8x16xf32>
    %15 = math.exp %14 : vector<2x8x16xf32>
    %c0_12 = arith.constant 0 : index
    %c0_13 = arith.constant 0 : index
    %16 = vector.load %arg7[%c0_12, %c0_13] : memref<2x8xf32, #tpu.memory_space<vmem>>, vector<2x8xf32>
    %17 = arith.mulf %11, %16 : vector<2x8xf32>
    %18 = arith.mulf %15, %5 : vector<2x8x16xf32>
    %cst_14 = arith.constant dense<0.000000e+00> : vector<2x8xf32>
    %19 = vector.multi_reduction <add>, %18, %cst_14 [2] : vector<2x8x16xf32> to vector<2x8xf32>
    %20 = arith.addf %17, %19 : vector<2x8xf32>
    %c0_15 = arith.constant 0 : index
    %c0_16 = arith.constant 0 : index
    %21 = vector.load %arg7[%c0_15, %c0_16] : memref<2x8xf32, #tpu.memory_space<vmem>>, vector<2x8xf32>
    tpu.vector_store %arg7[%c0_15, %c0_16], %20 {strides = array<i32>} : memref<2x8xf32, #tpu.memory_space<vmem>>, vector<2x8xf32>,
    %c0_17 = arith.constant 0 : index
    %c0_18 = arith.constant 0 : index
    %22 = vector.load %arg8[%c0_17, %c0_18] : memref<2x8xf32, #tpu.memory_space<vmem>>, vector<2x8xf32>
    %23 = arith.mulf %11, %22 : vector<2x8xf32>
    %cst_19 = arith.constant dense<0.000000e+00> : vector<2x8xf32>
    %24 = vector.multi_reduction <add>, %15, %cst_19 [2] : vector<2x8x16xf32> to vector<2x8xf32>
    %25 = arith.addf %23, %24 : vector<2x8xf32>
    %c0_20 = arith.constant 0 : index
    %c0_21 = arith.constant 0 : index
    %26 = vector.load %arg8[%c0_20, %c0_21] : memref<2x8xf32, #tpu.memory_space<vmem>>, vector<2x8xf32>
    tpu.vector_store %arg8[%c0_20, %c0_21], %25 {strides = array<i32>} : memref<2x8xf32, #tpu.memory_space<vmem>>, vector<2x8xf32>,
    %c0_22 = arith.constant 0 : index
    %c0_23 = arith.constant 0 : index
    %27 = vector.load %arg6[%c0_22, %c0_23] : memref<2x8xf32, #tpu.memory_space<vmem>>, vector<2x8xf32>
    tpu.vector_store %arg6[%c0_22, %c0_23], %9 {strides = array<i32>} : memref<2x8xf32, #tpu.memory_space<vmem>>, vector<2x8xf32>,
    %c0_i32_24 = arith.constant 0 : i32
    %28 = arith.cmpi eq, %arg1, %c0_i32_24 : i32
    %29 = arith.extui %28 : i1 to i32
    %c0_i32_25 = arith.constant 0 : i32
    %30 = arith.cmpi ne, %29, %c0_i32_25 : i32
    scf.if %30 {
      %c0_26 = arith.constant 0 : index
      %c0_27 = arith.constant 0 : index
      %31 = vector.load %arg7[%c0_26, %c0_27] : memref<2x8xf32, #tpu.memory_space<vmem>>, vector<2x8xf32>
      %c0_28 = arith.constant 0 : index
      %c0_29 = arith.constant 0 : index
      %32 = vector.load %arg8[%c0_28, %c0_29] : memref<2x8xf32, #tpu.memory_space<vmem>>, vector<2x8xf32>
      %33 = arith.divf %31, %32 : vector<2x8xf32>
      %c0_30 = arith.constant 0 : index
      %c0_31 = arith.constant 0 : index
      %c0_32 = arith.constant 0 : index
      %34 = vector.load %arg5[%c0_30, %c0_31, %c0_32] : memref<1x2x8xf32, #tpu.memory_space<vmem>>, vector<1x2x8xf32>
      %35 = vector.shape_cast %34 : vector<1x2x8xf32> to vector<2x8xf32>
      %36 = vector.shape_cast %33 : vector<2x8xf32> to vector<1x2x8xf32>
      tpu.vector_store %arg5[%c0_30, %c0_31, %c0_32], %36 {strides = array<i32>} : memref<1x2x8xf32, #tpu.memory_space<vmem>>, vector<1x2x8xf32>,
    } else {
    }
    return
  }
  func.func @transform_0(%arg0: i32, %arg1: i32) -> (i32, i32, i32) {
    %c0_i32 = arith.constant 0 : i32
    %c0_i32_0 = arith.constant 0 : i32
    %c0_i32_1 = arith.constant 0 : i32
    return %arg0, %c0_i32, %c0_i32_0 : i32, i32, i32
  }
  func.func @transform_1(%arg0: i32, %arg1: i32) -> (i32, i32, i32) {
    %c0_i32 = arith.constant 0 : i32
    %c0_i32_0 = arith.constant 0 : i32
    return %arg0, %c0_i32, %arg1 : i32, i32, i32
  }
  func.func @transform_2(%arg0: i32, %arg1: i32) -> (i32, i32, i32) {
    %c0_i32 = arith.constant 0 : i32
    %c0_i32_0 = arith.constant 0 : i32
    return %arg0, %c0_i32, %arg1 : i32, i32, i32
  }
  func.func @transform_3(%arg0: i32, %arg1: i32) -> (i32, i32, i32) {
    %c0_i32 = arith.constant 0 : i32
    %c0_i32_0 = arith.constant 0 : i32
    %c0_i32_1 = arith.constant 0 : i32
    return %arg0, %c0_i32, %c0_i32_0 : i32, i32, i32
  }
}

</mosaic_0001>

<llo_original>
// kernel: tpu_custom_call.1
$region0: #{tpu_custom_call.1}
  #allocation0 [shape = 'u32[]', space=smem, size = 0x4, offset = 0x4, fixed_abs, tag = 'smem constant byte address 0x4 - core index']
  #allocation1 [shape = 'u32[144,128]{1,0:T(1,128)}', space=vmem, size = 0x12000, scoped, tag = 'internal scratch']
  #allocation2 [shape = 'f32[2,8]{1,0:T(2,128)}', space=vmem, size = 0x400, scoped, tag = 'scratch operand']
  #allocation3 [shape = 'f32[2,8]{1,0:T(2,128)}', space=vmem, size = 0x400, scoped, tag = 'scratch operand']
  #allocation4 [shape = 'f32[2,8]{1,0:T(2,128)}', space=vmem, size = 0x400, scoped, tag = 'scratch operand']
  %s0 = inlined_call_operand.vmem [shape: f32[2,8,32], index: 0, kind: input, shape index: {}]
  %s1 = inlined_call_operand.vmem [shape: f32[2,32,16], index: 1, kind: input, shape index: {}]
  %s2 = inlined_call_operand.vmem [shape: f32[2,8,16], index: 2, kind: input, shape index: {}]
  %s3 = inlined_call_operand.hbm [shape: f32[1,2,8], index: 3, kind: output, shape index: {}]
  %s4 = sld [smem:[#allocation0]]
  $region30: #{tpu_custom_call.1} parent=0
    _
  %s6 = ssub.s32 1, %s4
  %s7 = scalar_select 0, %s6, %s4
  $region1: #{tpu_custom_call.1} parent=0
    #allocation5 [shape = 'u8[1024]{0}', space=vmem, size = 0x400, scoped, tag = 'output window, operand 0, single buffered']
    #allocation6 [shape = 's32[1]{0}', space=sflag, size = 0x4, scoped, tag = 'scoped memory for tpu_custom_call.1']
    %8 = vsyncpa [#allocation6], 0
    // Predicated region
    $region2: #{tpu_custom_call.1} parent=1 // pred_check
      _
    $region3: #{tpu_custom_call.1} parent=1 // pred_check_branch
      %10 = sbr.rel (0) target = $region5
    $region4: #{tpu_custom_call.1} parent=1 // pred_region
      _
    $region5: #{tpu_custom_call.1} parent=1 // pred_fallthru
      _
    // Predicated region
    $region6: #{tpu_custom_call.1} parent=1 // pred_check
      _
    $region7: #{tpu_custom_call.1} parent=1 // pred_check_branch
      %12 = sbr.rel (0) target = $region9
    $region8: #{tpu_custom_call.1} parent=1 // pred_region
      _
    $region9: #{tpu_custom_call.1} parent=1 // pred_fallthru
      _
    // Predicated region
    $region10: #{tpu_custom_call.1} parent=1 // pred_check
      _
    $region11: #{tpu_custom_call.1} parent=1 // pred_check_branch
      %14 = sbr.rel (0) target = $region13
    $region12: #{tpu_custom_call.1} parent=1 // pred_region
      _
    $region13: #{tpu_custom_call.1} parent=1 // pred_fallthru
      _
    %p15 = scmp.eq.s32.totalorder 0, 0
    // Predicated region
    $region14: #{tpu_custom_call.1} parent=1 // pred_check
      %p16 = pneg %p15
    $region15: #{tpu_custom_call.1} parent=1 // pred_check_branch
      %18 = sbr.rel (%p16) target = $region17
    $region16: #{tpu_custom_call.1} parent=1 // pred_region
      %vm19 = vcmask 58368
      %20 = vst.msk [vmem:[#allocation2] sm:$0x3] %vm19, -inf
      %21 = vst.msk [vmem:[#allocation3] sm:$0x3] %vm19, 0.0
      %22 = vst.msk [vmem:[#allocation4] sm:$0x3] %vm19, 0.0
    $region17: #{tpu_custom_call.1} parent=1 // pred_fallthru
      _
    %v23 = vld [vmem:[%s0] sm:$0xff]
    %v24 = vld [vmem:[%s0 + $0x8] sm:$0xff]
    %v25 = vld [vmem:[%s1] sm:$0xff]
    %v26 = vld [vmem:[%s1 + $0x8] sm:$0xff]
    %v27 = vld [vmem:[%s1 + $0x10] sm:$0xff]
    %v28 = vld [vmem:[%s1 + $0x18] sm:$0xff]
    %v29 = vld [vmem:[%s1 + $0x20] sm:$0xff]
    %v30 = vld [vmem:[%s1 + $0x28] sm:$0xff]
    %v31 = vld [vmem:[%s1 + $0x30] sm:$0xff]
    %v32 = vld [vmem:[%s1 + $0x38] sm:$0xff]
    %v33 = vld [vmem:[%s2] sm:$0xff]
    %v34 = vld [vmem:[%s2 + $0x8] sm:$0xff]
    %vm35 = vcmask 261120
    %v37 = vsel %vm35, %v23, 0
    %39 = vmatprep.subr.mxu0 0.0
    %40 = vmatpush1.msra.mxu0 0.0
    %41 = vmatprep.subr.mxu0 0.0
    %42 = vmatpush1.msra.mxu0 0.0
    %43 = vmatprep.subr.mxu0 0.0
    %44 = vmatpush1.msra.mxu0 0.0
    %45 = vmatprep.subr.mxu0 0.0
    %46 = vmatpush1.msra.mxu0 0.0
    %47 = vmatprep.subr.mxu0 0.0
    %48 = vmatpush1.msra.mxu0 0.0
    %49 = vmatprep.subr.mxu0 0.0
    %50 = vmatpush1.msra.mxu0 0.0
    %51 = vmatprep.subr.mxu0 0.0
    %52 = vmatpush1.msra.mxu0 0.0
    %53 = vmatprep.subr.mxu0 0.0
    %54 = vmatpush1.msra.mxu0 0.0
    %55 = vmatprep.subr.mxu0 0.0
    %56 = vmatpush1.msra.mxu0 0.0
    %57 = vmatprep.subr.mxu0 0.0
    %58 = vmatpush1.msra.mxu0 0.0
    %59 = vmatprep.subr.mxu0 0.0
    %60 = vmatpush1.msra.mxu0 0.0
    %61 = vmatprep.subr.mxu0 0.0
    %62 = vmatpush1.msra.mxu0 0.0
    %63 = vmatprep.subr.mxu0 0.0
    %64 = vmatpush1.msra.mxu0 %v28
    %65 = vmatprep.subr.mxu0 0.0
    %66 = vmatpush1.msra.mxu0 %v27
    %67 = vmatprep.subr.mxu0 0.0
    %68 = vmatpush1.msra.mxu0 %v26
    %69 = vmatprep.subr.mxu0 0.0
    %70 = vmatpush1.msra.mxu0 %v25
    %71 = vmatprep.subr.mxu0 0.0
    %72 = vmatpush2.msra.mxu0 0.0
    %73 = vmatprep.subr.mxu0 0.0
    %74 = vmatpush2.msra.mxu0 0.0
    %75 = vmatprep.subr.mxu0 0.0
    %76 = vmatpush2.msra.mxu0 0.0
    %77 = vmatprep.subr.mxu0 0.0
    %78 = vmatpush2.msra.mxu0 0.0
    %79 = vmatprep.subr.mxu0 0.0
    %80 = vmatpush2.msra.mxu0 0.0
    %81 = vmatprep.subr.mxu0 0.0
    %82 = vmatpush2.msra.mxu0 0.0
    %83 = vmatprep.subr.mxu0 0.0
    %84 = vmatpush2.msra.mxu0 0.0
    %85 = vmatprep.subr.mxu0 0.0
    %86 = vmatpush2.msra.mxu0 0.0
    %87 = vmatprep.subr.mxu0 0.0
    %88 = vmatpush2.msra.mxu0 0.0
    %89 = vmatprep.subr.mxu0 0.0
    %90 = vmatpush2.msra.mxu0 0.0
    %91 = vmatprep.subr.mxu0 0.0
    %92 = vmatpush2.msra.mxu0 0.0
    %93 = vmatprep.subr.mxu0 0.0
    %94 = vmatpush2.msra.mxu0 0.0
    %95 = vmatprep.subr.mxu0 0.0
    %96 = vmatpush2.msra.mxu0 0.0
    %97 = vmatprep.subr.mxu0 0.0
    %98 = vmatpush2.msra.mxu0 0.0
    %99 = vmatprep.subr.mxu0 0.0
    %100 = vmatpush2.msra.mxu0 0.0
    %101 = vmatprep.subr.mxu0 0.0
    %102 = vmatpush2.msra.mxu0 0.0
    %103 = vmatprep.mubr.f32.mxu0 0.0
    %104 = vmatmul.mubr.f32.gmra.mxu0 %v37
    %v105 = vpop.f32.mrf.mxu0
    %v106 = vadd.f32 0.0, %v105
    %v107 = vpop.f32.mrf.mxu0
    %108 = vdwg.mxu0
    %v110 = vsel %vm35, %v24, 0
    %112 = vmatprep.subr.mxu0 0.0
    %113 = vmatpush1.msra.mxu0 0.0
    %114 = vmatprep.subr.mxu0 0.0
    %115 = vmatpush1.msra.mxu0 0.0
    %116 = vmatprep.subr.mxu0 0.0
    %117 = vmatpush1.msra.mxu0 0.0
    %118 = vmatprep.subr.mxu0 0.0
    %119 = vmatpush1.msra.mxu0 0.0
    %120 = vmatprep.subr.mxu0 0.0
    %121 = vmatpush1.msra.mxu0 0.0
    %122 = vmatprep.subr.mxu0 0.0
    %123 = vmatpush1.msra.mxu0 0.0
    %124 = vmatprep.subr.mxu0 0.0
    %125 = vmatpush1.msra.mxu0 0.0
    %126 = vmatprep.subr.mxu0 0.0
    %127 = vmatpush1.msra.mxu0 0.0
    %128 = vmatprep.subr.mxu0 0.0
    %129 = vmatpush1.msra.mxu0 0.0
    %130 = vmatprep.subr.mxu0 0.0
    %131 = vmatpush1.msra.mxu0 0.0
    %132 = vmatprep.subr.mxu0 0.0
    %133 = vmatpush1.msra.mxu0 0.0
    %134 = vmatprep.subr.mxu0 0.0
    %135 = vmatpush1.msra.mxu0 0.0
    %136 = vmatprep.subr.mxu0 0.0
    %137 = vmatpush1.msra.mxu0 %v32
    %138 = vmatprep.subr.mxu0 0.0
    %139 = vmatpush1.msra.mxu0 %v31
    %140 = vmatprep.subr.mxu0 0.0
    %141 = vmatpush1.msra.mxu0 %v30
    %142 = vmatprep.subr.mxu0 0.0
    %143 = vmatpush1.msra.mxu0 %v29
    %144 = vmatprep.subr.mxu0 0.0
    %145 = vmatpush2.msra.mxu0 0.0
    %146 = vmatprep.subr.mxu0 0.0
    %147 = vmatpush2.msra.mxu0 0.0
    %148 = vmatprep.subr.mxu0 0.0
    %149 = vmatpush2.msra.mxu0 0.0
    %150 = vmatprep.subr.mxu0 0.0
    %151 = vmatpush2.msra.mxu0 0.0
    %152 = vmatprep.subr.mxu0 0.0
    %153 = vmatpush2.msra.mxu0 0.0
    %154 = vmatprep.subr.mxu0 0.0
    %155 = vmatpush2.msra.mxu0 0.0
    %156 = vmatprep.subr.mxu0 0.0
    %157 = vmatpush2.msra.mxu0 0.0
    %158 = vmatprep.subr.mxu0 0.0
    %159 = vmatpush2.msra.mxu0 0.0
    %160 = vmatprep.subr.mxu0 0.0
    %161 = vmatpush2.msra.mxu0 0.0
    %162 = vmatprep.subr.mxu0 0.0
    %163 = vmatpush2.msra.mxu0 0.0
    %164 = vmatprep.subr.mxu0 0.0
    %165 = vmatpush2.msra.mxu0 0.0
    %166 = vmatprep.subr.mxu0 0.0
    %167 = vmatpush2.msra.mxu0 0.0
    %168 = vmatprep.subr.mxu0 0.0
    %169 = vmatpush2.msra.mxu0 0.0
    %170 = vmatprep.subr.mxu0 0.0
    %171 = vmatpush2.msra.mxu0 0.0
    %172 = vmatprep.subr.mxu0 0.0
    %173 = vmatpush2.msra.mxu0 0.0
    %174 = vmatprep.subr.mxu0 0.0
    %175 = vmatpush2.msra.mxu0 0.0
    %176 = vmatprep.mubr.f32.mxu0 0.0
    %177 = vmatmul.mubr.f32.gmra.mxu0 %v110
    %v178 = vpop.f32.mrf.mxu0
    %v179 = vadd.f32 0.0, %v178
    %v180 = vpop.f32.mrf.mxu0
    %181 = vdwg.mxu0
    %v182 = vld [vmem:[#allocation2] sm:$0x3]
    %vm183 = vcmask 130048
    %v184 = vsel %vm183, %v106, -inf
    %185 = vmax.xlane.f32.xlu0 %v184
    %v186 = vpop.xlane.xlu0 %185
    %v187 = vsel %vm183, %v179, -inf
    %188 = vmax.xlane.f32.xlu0 %v187
    %v189 = vpop.xlane.xlu0 %188
    %v192 = vlaneseq
    %v193 = vand.u32 %v192, 127
    %v194 = vlaneseq
    %v195 = vshrl.u32 %v194, 7
    %v196 = vsub.s32 %v193, %v195
    %v197 = vrot.slane %v186, %v196
    %v198 = vlaneseq
    %v199 = vshrl.u32 %v198, 7
    %v200 = vsub.s32 %v193, %v199
    %v201 = vrot.slane %v189, %v200
    %vm202 = vcmask 1041409
    %v203 = vsel %vm202, %v201, %v197
    %v205 = vmax.f32 %v182, %v203
    %v206 = vsub.f32 %v182, %v205
    %v207 = vmul.f32 %v206, 1.442695
    %v208 = vpow.pop %v207
    %v209 = vlaneseq
    %v210 = vshrl.u32 %v209, 7
    %v211 = vsub.s32 0, %v210
    %v212 = vrot.slane %v205, %v211
    %214 = vbcast.lane.b32.xlu0 %v212, 256
    %v215 = vpop.permute.xlu0 %214
    %v216 = vlaneseq
    %v217 = vshrl.u32 %v216, 7
    %v218 = vsub.s32 1, %v217
    %v219 = vrot.slane %v205, %v218
    %221 = vbcast.lane.b32.xlu0 %v219, 256
    %v222 = vpop.permute.xlu0 %221
    %v223 = vsub.f32 %v106, %v215
    %v224 = vsub.f32 %v179, %v222
    %v225 = vmul.f32 %v223, 1.442695
    %v226 = vpow.pop %v225
    %v227 = vmul.f32 %v224, 1.442695
    %v228 = vpow.pop %v227
    %v229 = vld [vmem:[#allocation3] sm:$0x3]
    %v230 = vmul.f32 %v208, %v229
    %v231 = vmul.f32 %v226, %v33
    %v232 = vmul.f32 %v228, %v34
    %v233 = vsel %vm183, %v231, 0.0
    %234 = vadd.xlane.f32.xlu0 %v233
    %v235 = vpop.xlane.xlu0 %234
    %v236 = vsel %vm183, %v232, 0.0
    %237 = vadd.xlane.f32.xlu0 %v236
    %v238 = vpop.xlane.xlu0 %237
    %v241 = vlaneseq
    %v242 = vshrl.u32 %v241, 7
    %v243 = vsub.s32 %v193, %v242
    %v244 = vrot.slane %v235, %v243
    %v245 = vlaneseq
    %v246 = vshrl.u32 %v245, 7
    %v247 = vsub.s32 %v193, %v246
    %v248 = vrot.slane %v238, %v247
    %v249 = vsel %vm202, %v248, %v244
    %v251 = vadd.f32 %v230, %v249
    %vm252 = vcmask 58368
    %253 = vst.msk [vmem:[#allocation3] sm:$0x3] %vm252, %v251
    %v254 = vld [vmem:[#allocation4] sm:$0x3]
    %v255 = vmul.f32 %v208, %v254
    %v256 = vsel %vm183, %v226, 0.0
    %257 = vadd.xlane.f32.xlu0 %v256
    %v258 = vpop.xlane.xlu0 %257
    %v259 = vsel %vm183, %v228, 0.0
    %260 = vadd.xlane.f32.xlu0 %v259
    %v261 = vpop.xlane.xlu0 %260
    %v264 = vlaneseq
    %v265 = vshrl.u32 %v264, 7
    %v266 = vsub.s32 %v193, %v265
    %v267 = vrot.slane %v258, %v266
    %v268 = vlaneseq
    %v269 = vshrl.u32 %v268, 7
    %v270 = vsub.s32 %v193, %v269
    %v271 = vrot.slane %v261, %v270
    %v272 = vsel %vm202, %v271, %v267
    %v274 = vadd.f32 %v255, %v272
    %275 = vst.msk [vmem:[#allocation4] sm:$0x3] %vm252, %v274
    %276 = vst.msk [vmem:[#allocation2] sm:$0x3] %vm252, %v205
    // Predicated region
    $region18: #{tpu_custom_call.1} parent=1 // pred_check
      %p277 = pneg %p15
    $region19: #{tpu_custom_call.1} parent=1 // pred_check_branch
      %279 = sbr.rel (%p277) target = $region21
    $region20: #{tpu_custom_call.1} parent=1 // pred_region
      %v280 = vld [vmem:[#allocation3] sm:$0x3]
      %v281 = vld [vmem:[#allocation4] sm:$0x3]
      %v282 = vrcp.pop %v281
      %v283 = vmul.f32 %v280, %v282
      %284 = vst.msk [vmem:[#allocation5] sm:$0x3] %vm252, %v283
    $region21: #{tpu_custom_call.1} parent=1 // pred_fallthru
      _
    // Predicated region
    $region22: #{tpu_custom_call.1} parent=1 // pred_check
      _
    $region23: #{tpu_custom_call.1} parent=1 // pred_check_branch
      %286 = sbr.rel (0) target = $region25
    $region24: #{tpu_custom_call.1} parent=1 // pred_region
      %s288 = ssub.s32 32, 32
      %289 = vsyncadd [#allocation6], %s288
      %s291 = sshll.u32 [#allocation5], 4
      %s292 = int_to_ptr.vmem [resolvable:$true] %s291
      %294 = dma.vmem_to_hbm [thread:$0]  %s292, 32, %s3, [#allocation6]
    $region25: #{tpu_custom_call.1} parent=1 // pred_fallthru
      _
    // Predicated region
    $region26: #{tpu_custom_call.1} parent=1 // pred_check
      _
    $region27: #{tpu_custom_call.1} parent=1 // pred_check_branch
      %296 = sbr.rel (0) target = $region29
    $region28: #{tpu_custom_call.1} parent=1 // pred_region
      %297 = dma.done [#allocation6], 32
    $region29: #{tpu_custom_call.1} parent=1 // pred_fallthru
      _
    %298 = vsyncpa [#allocation6], 1

</llo_original>
